<compile_context>
chip_gen: v7x
topology: tpu7x:2x2x1
jax: 0.10.0
libtpu: 0.0.40
codegen_flags: <defaults>
</compile_context>

<pallas_src>
import functools

import numpy as np
import jax
import jax.numpy as jnp
from jax.experimental import pallas as pl
from jax.experimental.pallas import tpu as pltpu


def _round_up(x, m):
    return (x + m - 1) // m * m


def _ngram_kernel(ids_ref, table_ref, bias_ref, out_ref):
    """One M-tile: logits = onehot(ids) @ table + bias.

    ids_ref:   (M_TILE, n-1) int32, already offset into the k-th table block;
               masked / padded slots point at an all-zero table row.
    table_ref: ((n-1)*Vp, Vp) f32 fused per-slot tables  M_k = E @ W_k^T.
    bias_ref:  (1, Vp) f32.
    out_ref:   (M_TILE, Vp) f32 (lane-dense store).
    """
    ids = ids_ref[...]
    table = table_ref[...]
    m, n_ctx = ids.shape
    k_total = table.shape[0]

    # Combined one-hot over the (n-1) disjoint table blocks (VALU only).
    iota_k = jax.lax.broadcasted_iota(jnp.int32, (m, k_total), 1)
    sel = ids[:, 0:1] == iota_k
    for k in range(1, n_ctx):
        sel = sel | (ids[:, k:k + 1] == iota_k)
    onehot = sel.astype(jnp.float32)

    # Single MXU matmul per tile; exact row selection + (n-1)-term sum.
    logits = jnp.dot(onehot, table, preferred_element_type=jnp.float32)
    out_ref[...] = (logits + bias_ref[...]).astype(out_ref.dtype)


@functools.partial(jax.jit, static_argnames=("n", "m_tile"))
def repr_ngram_forward(x, embedding, weight, bias, n, m_tile=256):
    """x: (B, L) int ids; embedding: (V, D); weight: (V, D*(n-1)); bias: (V,)."""
    B, L = x.shape
    V, D = embedding.shape
    F = D * (n - 1)

    # ---- pad vocab to a lane-dense width; reserve one all-zero PAD row ----
    v_pad = _round_up(V + 1, 128)
    pad_id = V                                     # zero row in padded tables

    f32 = jnp.float32
    emb_p = jnp.zeros((v_pad, D), f32).at[:V].set(embedding.astype(f32))
    w_p = jnp.zeros((v_pad, F), f32).at[:V].set(weight.astype(f32))
    bias_p = jnp.zeros((1, v_pad), f32).at[0, :V].set(bias.astype(f32))

    # ---- fused per-slot tables  M_k = E @ W_k^T, stacked on the K axis ----
    tables = [
        jnp.dot(emb_p, w_p[:, k * D:(k + 1) * D].T,
                precision=jax.lax.Precision.HIGHEST)
        for k in range(n - 1)
    ]
    table = jnp.concatenate(tables, axis=0)        # ((n-1)*Vp, Vp)

    # ---- shifted window ids, offset into the k-th block; j < n-1 -> PAD ----
    pos = jnp.arange(L)[None, :]
    ids_k = []
    for k in range(n - 1):
        s = (n - 1) - k
        shifted = jnp.roll(x.astype(jnp.int32), s, axis=1)
        shifted = jnp.where(pos >= (n - 1), shifted, pad_id)
        ids_k.append(shifted + k * v_pad)
    ids = jnp.stack(ids_k, axis=-1).reshape(B * L, n - 1).astype(jnp.int32)

    # ---- pad the flattened token axis to a multiple of the M tile ----
    bl = B * L
    m_tile = min(m_tile, _round_up(bl, 8))
    bl_pad = _round_up(bl, m_tile)
    if bl_pad != bl:
        ids = jnp.concatenate(
            [ids, jnp.full((bl_pad - bl, n - 1), pad_id, jnp.int32)], axis=0)

    out = pl.pallas_call(
        _ngram_kernel,
        out_shape=jax.ShapeDtypeStruct((bl_pad, v_pad), jnp.float32),
        grid_spec=pltpu.PrefetchScalarGridSpec(
            num_scalar_prefetch=0,
            grid=(bl_pad // m_tile,),
            in_specs=[
                # streamed per-tile token-id block
                pl.BlockSpec((m_tile, n - 1), lambda i: (i, 0)),
                # fused tables + bias stay VMEM-resident across the grid
                pl.BlockSpec(((n - 1) * v_pad, v_pad), lambda i: (0, 0)),
                pl.BlockSpec((1, v_pad), lambda i: (0, 0)),
            ],
            out_specs=pl.BlockSpec((m_tile, v_pad), lambda i: (i, 0)),
        ),
        compiler_params=pltpu.CompilerParams(
            dimension_semantics=("parallel",),      # megacore sharding on v7x
            vmem_limit_bytes=32 * 1024 * 1024,      # fits v5e / v6e / v7x
        ),
    )(ids, table, bias_p)

    return out[:bl, :V].reshape(B, L, V)


if __name__ == "__main__":
    # Module hyperparameters (small, consistent with the PyTorch __init__).
    D, n = 32, 3
    BOSalphabet = [f"sym{i}" for i in range(14)] + ["BOS", "EOS"]   # V = 16
    V = len(BOSalphabet)
    B, L = 2, 8
    F = D * (n - 1)

    # Deterministic parameter / input init.
    key = jax.random.PRNGKey(0)
    k1, k2, k3, k4 = jax.random.split(key, 4)
    embedding = jax.random.normal(k1, (V, D), dtype=jnp.float32)
    bound = 1.0 / np.sqrt(F)
    weight = jax.random.uniform(k2, (V, F), jnp.float32, -bound, bound)
    bias = jax.random.uniform(k3, (V,), jnp.float32, -bound, bound)
    x = jax.random.randint(k4, (B, L), 0, V, dtype=jnp.int32)

    logits = repr_ngram_forward(x, embedding, weight, bias, n)
    logits = jax.block_until_ready(logits)

    # Pure-numpy (float64) reference reproducing the PyTorch forward semantics.
    emb_np = np.asarray(embedding, np.float64)
    w_np = np.asarray(weight, np.float64)
    b_np = np.asarray(bias, np.float64)
    xe = emb_np[np.asarray(x)]                      # (B, L, D)
    enc_ref = np.zeros((B, L, F), np.float64)
    for i in range(B):
        for j in range(n - 1, L):
            enc_ref[i, j, :] = xe[i, j - (n - 1):j, :].reshape(-1)
    ref = (enc_ref.reshape(B * L, F) @ w_np.T + b_np).reshape(B, L, V)

    np.testing.assert_allclose(np.asarray(logits), ref, rtol=1e-4, atol=1e-4)
    print("KERNEL_OK")
</pallas_src>

<mosaic_0001>
module attributes {stable_mosaic.version = 11 : i64} {
  func.func @_ngram_kernel(%arg0: i32, %arg1: memref<16x2xi32, #tpu.memory_space<vmem>>, %arg2: memref<256x128xf32, #tpu.memory_space<vmem>>, %arg3: memref<1x128xf32, #tpu.memory_space<vmem>>, %arg4: memref<16x128xf32, #tpu.memory_space<vmem>>) attributes {dimension_semantics = [#tpu.dimension_semantics<parallel>], iteration_bounds = array<i64: 1>, scalar_prefetch = 0 : i64, scratch_operands = 0 : i64, tpu.core_type = #tpu.core_type<tc>, window_params = [{transform_indices = @transform_0, window_bounds = array<i64: 16, 2>}, {pipeline_mode = #tpu.pipeline_mode<synchronous>, transform_indices = @transform_1, window_bounds = array<i64: 256, 128>}, {pipeline_mode = #tpu.pipeline_mode<synchronous>, transform_indices = @transform_2, window_bounds = array<i64: 1, 128>}, {transform_indices = @transform_3, window_bounds = array<i64: 16, 128>}]} {
    %c0 = arith.constant 0 : index
    %c0_0 = arith.constant 0 : index
    %0 = vector.load %arg1[%c0, %c0_0] : memref<16x2xi32, #tpu.memory_space<vmem>>, vector<16x2xi32>
    %c0_1 = arith.constant 0 : index
    %c0_2 = arith.constant 0 : index
    %1 = vector.load %arg2[%c0_1, %c0_2] : memref<256x128xf32, #tpu.memory_space<vmem>>, vector<256x128xf32>
    %2 = tpu.iota {dimensions = array<i32: 1>} : vector<16x256xi32>
    %3 = vector.extract_strided_slice %0 {offsets = [0, 0], sizes = [16, 1], strides = [1, 1]} : vector<16x2xi32> to vector<16x1xi32>
    %4 = vector.broadcast %3 : vector<16x1xi32> to vector<16x256xi32>
    %5 = arith.cmpi eq, %4, %2 : vector<16x256xi32>
    %6 = vector.extract_strided_slice %0 {offsets = [0, 1], sizes = [16, 1], strides = [1, 1]} : vector<16x2xi32> to vector<16x1xi32>
    %7 = vector.broadcast %6 : vector<16x1xi32> to vector<16x256xi32>
    %8 = arith.cmpi eq, %7, %2 : vector<16x256xi32>
    %9 = arith.ori %5, %8 : vector<16x256xi1>
    %10 = arith.extui %9 : vector<16x256xi1> to vector<16x256xi32>
    %11 = arith.sitofp %10 : vector<16x256xi32> to vector<16x256xf32>
    %cst = arith.constant dense<0.000000e+00> : vector<16x128xf32>
    %12 = tpu.matmul %11, %1, %cst {dimension_numbers = #tpu.dot_dimension_numbers<[1], [0], [0], [1], [0, 0, 1, 1], [], []>} : vector<16x256xf32>, vector<256x128xf32>, vector<16x128xf32> -> vector<16x128xf32>
    %c0_3 = arith.constant 0 : index
    %c0_4 = arith.constant 0 : index
    %13 = vector.load %arg3[%c0_3, %c0_4] : memref<1x128xf32, #tpu.memory_space<vmem>>, vector<1x128xf32>
    %14 = vector.broadcast %13 : vector<1x128xf32> to vector<16x128xf32>
    %15 = arith.addf %12, %14 : vector<16x128xf32>
    %c0_5 = arith.constant 0 : index
    %c0_6 = arith.constant 0 : index
    %16 = vector.load %arg4[%c0_5, %c0_6] : memref<16x128xf32, #tpu.memory_space<vmem>>, vector<16x128xf32>
    tpu.vector_store %arg4[%c0_5, %c0_6], %15 {strides = array<i32>} : memref<16x128xf32, #tpu.memory_space<vmem>>, vector<16x128xf32>,
    return
  }
  func.func @transform_0(%arg0: i32) -> (i32, i32) {
    %c0_i32 = arith.constant 0 : i32
    %c0_i32_0 = arith.constant 0 : i32
    return %arg0, %c0_i32 : i32, i32
  }
  func.func @transform_1(%arg0: i32) -> (i32, i32) {
    %c0_i32 = arith.constant 0 : i32
    %c0_i32_0 = arith.constant 0 : i32
    %c0_i32_1 = arith.constant 0 : i32
    return %c0_i32, %c0_i32_0 : i32, i32
  }
  func.func @transform_2(%arg0: i32) -> (i32, i32) {
    %c0_i32 = arith.constant 0 : i32
    %c0_i32_0 = arith.constant 0 : i32
    %c0_i32_1 = arith.constant 0 : i32
    return %c0_i32, %c0_i32_0 : i32, i32
  }
  func.func @transform_3(%arg0: i32) -> (i32, i32) {
    %c0_i32 = arith.constant 0 : i32
    %c0_i32_0 = arith.constant 0 : i32
    return %arg0, %c0_i32 : i32, i32
  }
}

</mosaic_0001>

<llo_original>
// kernel: repr_ngram_forward.1
$region0: #{repr_ngram_forward.1}
  #allocation0 [shape = 'u32[]', space=smem, size = 0x4, offset = 0x4, fixed_abs, tag = 'smem constant byte address 0x4 - core index']
  #allocation1 [shape = 'u32[144,128]{1,0:T(1,128)}', space=vmem, size = 0x12000, scoped, tag = 'internal scratch']
  %s0 = inlined_call_operand.vmem [shape: s32[16,2], index: 0, kind: input, shape index: {}]
  %s1 = inlined_call_operand.vmem [shape: f32[256,128], index: 1, kind: input, shape index: {}]
  %s2 = inlined_call_operand.vmem [shape: f32[1,128], index: 2, kind: input, shape index: {}]
  %s3 = inlined_call_operand.vmem [shape: f32[16,128], index: 3, kind: output, shape index: {}]
  %s4 = sld [smem:[#allocation0]]
  $region22: #{repr_ngram_forward.1} parent=0
    _
  %s6 = ssub.s32 1, %s4
  %s7 = scalar_select 0, %s6, %s4
  // Predicated region
  $region2: #{repr_ngram_forward.1} parent=0 // pred_check
    _
  $region3: #{repr_ngram_forward.1} parent=0 // pred_check_branch
    %9 = sbr.rel (0) target = $region5
  $region4: #{repr_ngram_forward.1} parent=0 // pred_region
    _
  $region5: #{repr_ngram_forward.1} parent=0 // pred_fallthru
    _
  // Predicated region
  $region6: #{repr_ngram_forward.1} parent=0 // pred_check
    _
  $region7: #{repr_ngram_forward.1} parent=0 // pred_check_branch
    %11 = sbr.rel (0) target = $region9
  $region8: #{repr_ngram_forward.1} parent=0 // pred_region
    _
  $region9: #{repr_ngram_forward.1} parent=0 // pred_fallthru
    _
  // Predicated region
  $region10: #{repr_ngram_forward.1} parent=0 // pred_check
    _
  $region11: #{repr_ngram_forward.1} parent=0 // pred_check_branch
    %13 = sbr.rel (0) target = $region13
  $region12: #{repr_ngram_forward.1} parent=0 // pred_region
    _
  $region13: #{repr_ngram_forward.1} parent=0 // pred_fallthru
    _
  %v14 = vld [vmem:[%s0] sm:$0xff]
  %v15 = vld [vmem:[%s0 + $0x8] sm:$0xff]
  %v16 = vld [vmem:[%s1] sm:$0xff]
  %v17 = vld [vmem:[%s1 + $0x8] sm:$0xff]
  %v18 = vld [vmem:[%s1 + $0x10] sm:$0xff]
  %v19 = vld [vmem:[%s1 + $0x18] sm:$0xff]
  %v20 = vld [vmem:[%s1 + $0x20] sm:$0xff]
  %v21 = vld [vmem:[%s1 + $0x28] sm:$0xff]
  %v22 = vld [vmem:[%s1 + $0x30] sm:$0xff]
  %v23 = vld [vmem:[%s1 + $0x38] sm:$0xff]
  %v24 = vld [vmem:[%s1 + $0x40] sm:$0xff]
  %v25 = vld [vmem:[%s1 + $0x48] sm:$0xff]
  %v26 = vld [vmem:[%s1 + $0x50] sm:$0xff]
  %v27 = vld [vmem:[%s1 + $0x58] sm:$0xff]
  %v28 = vld [vmem:[%s1 + $0x60] sm:$0xff]
  %v29 = vld [vmem:[%s1 + $0x68] sm:$0xff]
  %v30 = vld [vmem:[%s1 + $0x70] sm:$0xff]
  %v31 = vld [vmem:[%s1 + $0x78] sm:$0xff]
  %v32 = vld [vmem:[%s1 + $0x80] sm:$0xff]
  %v33 = vld [vmem:[%s1 + $0x88] sm:$0xff]
  %v34 = vld [vmem:[%s1 + $0x90] sm:$0xff]
  %v35 = vld [vmem:[%s1 + $0x98] sm:$0xff]
  %v36 = vld [vmem:[%s1 + $0xa0] sm:$0xff]
  %v37 = vld [vmem:[%s1 + $0xa8] sm:$0xff]
  %v38 = vld [vmem:[%s1 + $0xb0] sm:$0xff]
  %v39 = vld [vmem:[%s1 + $0xb8] sm:$0xff]
  %v40 = vld [vmem:[%s1 + $0xc0] sm:$0xff]
  %v41 = vld [vmem:[%s1 + $0xc8] sm:$0xff]
  %v42 = vld [vmem:[%s1 + $0xd0] sm:$0xff]
  %v43 = vld [vmem:[%s1 + $0xd8] sm:$0xff]
  %v44 = vld [vmem:[%s1 + $0xe0] sm:$0xff]
  %v45 = vld [vmem:[%s1 + $0xe8] sm:$0xff]
  %v46 = vld [vmem:[%s1 + $0xf0] sm:$0xff]
  %v47 = vld [vmem:[%s1 + $0xf8] sm:$0xff]
  %v48 = vlaneseq
  %v49 = vand.u32 %v48, 127
  %v50 = vadd.s32 %v49, 128
  %51 = vset.pattern.permute.xlu0 0
  %52 = vperm.xlu0 %51, %v14
  %v53 = vpop.permute.xlu0 %52
  %54 = vset.pattern.permute.xlu0 0
  %55 = vperm.xlu0 %54, %v15
  %v56 = vpop.permute.xlu0 %55
  %vm57 = vcmp.eq.s32.totalorder %v53, %v49
  %vm58 = vcmp.eq.s32.totalorder %v53, %v50
  %vm59 = vcmp.eq.s32.totalorder %v56, %v49
  %vm60 = vcmp.eq.s32.totalorder %v56, %v50
  %61 = vset.pattern.permute.xlu0 1
  %62 = vperm.xlu0 %61, %v14
  %v63 = vpop.permute.xlu0 %62
  %64 = vset.pattern.permute.xlu0 1
  %65 = vperm.xlu0 %64, %v15
  %v66 = vpop.permute.xlu0 %65
  %vm67 = vcmp.eq.s32.totalorder %v63, %v49
  %vm68 = vcmp.eq.s32.totalorder %v63, %v50
  %vm69 = vcmp.eq.s32.totalorder %v66, %v49
  %vm70 = vcmp.eq.s32.totalorder %v66, %v50
  %vm71 = vmor %vm57, %vm67
  %vm72 = vmor %vm58, %vm68
  %vm73 = vmor %vm59, %vm69
  %vm74 = vmor %vm60, %vm70
  %v75 = vsel %vm71, 1, 0
  %v76 = vsel %vm72, 1, 0
  %v77 = vsel %vm73, 1, 0
  %v78 = vsel %vm74, 1, 0
  %v79 = vcvt.s32.f32 %v75
  %v80 = vcvt.s32.f32 %v76
  %v81 = vcvt.s32.f32 %v77
  %v82 = vcvt.s32.f32 %v78
  %v83 = vld [vmem:[%s2] sm:$0x1]
  %v85 = vlaneseq
  %v86 = vshrl.u32 %v85, 7
  %v87 = vsub.s32 0, %v86
  %v88 = vrot.slane %v83, %v87
  %90 = vmatprep.subr.mxu0 0.0
  %91 = vmatpush1.msra.mxu0 %v16
  %92 = vmatprep.subr.mxu0 0.0
  %93 = vmatpush1.msra.mxu0 %v17
  %94 = vmatprep.subr.mxu0 0.0
  %95 = vmatpush1.msra.mxu0 %v18
  %96 = vmatprep.subr.mxu0 0.0
  %97 = vmatpush1.msra.mxu0 %v19
  %98 = vmatprep.subr.mxu0 0.0
  %99 = vmatpush1.msra.mxu0 %v20
  %100 = vmatprep.subr.mxu0 0.0
  %101 = vmatpush1.msra.mxu0 %v21
  %102 = vmatprep.subr.mxu0 0.0
  %103 = vmatpush1.msra.mxu0 %v22
  %104 = vmatprep.subr.mxu0 0.0
  %105 = vmatpush1.msra.mxu0 %v23
  %106 = vmatprep.subr.mxu0 0.0
  %107 = vmatpush1.msra.mxu0 %v24
  %108 = vmatprep.subr.mxu0 0.0
  %109 = vmatpush1.msra.mxu0 %v25
  %110 = vmatprep.subr.mxu0 0.0
  %111 = vmatpush1.msra.mxu0 %v26
  %112 = vmatprep.subr.mxu0 0.0
  %113 = vmatpush1.msra.mxu0 %v27
  %114 = vmatprep.subr.mxu0 0.0
  %115 = vmatpush1.msra.mxu0 %v28
  %116 = vmatprep.subr.mxu0 0.0
  %117 = vmatpush1.msra.mxu0 %v29
  %118 = vmatprep.subr.mxu0 0.0
  %119 = vmatpush1.msra.mxu0 %v30
  %120 = vmatprep.subr.mxu0 0.0
  %121 = vmatpush1.msra.mxu0 %v31
  %122 = vmatprep.subr.mxu0 0.0
  %123 = vmatpush1.msra.mxu0 %v32
  %124 = vmatprep.subr.mxu0 0.0
  %125 = vmatpush1.msra.mxu0 %v33
  %126 = vmatprep.subr.mxu0 0.0
  %127 = vmatpush1.msra.mxu0 %v34
  %128 = vmatprep.subr.mxu0 0.0
  %129 = vmatpush1.msra.mxu0 %v35
  %130 = vmatprep.subr.mxu0 0.0
  %131 = vmatpush1.msra.mxu0 %v36
  %132 = vmatprep.subr.mxu0 0.0
  %133 = vmatpush1.msra.mxu0 %v37
  %134 = vmatprep.subr.mxu0 0.0
  %135 = vmatpush1.msra.mxu0 %v38
  %136 = vmatprep.subr.mxu0 0.0
  %137 = vmatpush1.msra.mxu0 %v39
  %138 = vmatprep.subr.mxu0 0.0
  %139 = vmatpush1.msra.mxu0 %v40
  %140 = vmatprep.subr.mxu0 0.0
  %141 = vmatpush1.msra.mxu0 %v41
  %142 = vmatprep.subr.mxu0 0.0
  %143 = vmatpush1.msra.mxu0 %v42
  %144 = vmatprep.subr.mxu0 0.0
  %145 = vmatpush1.msra.mxu0 %v43
  %146 = vmatprep.subr.mxu0 0.0
  %147 = vmatpush1.msra.mxu0 %v44
  %148 = vmatprep.subr.mxu0 0.0
  %149 = vmatpush1.msra.mxu0 %v45
  %150 = vmatprep.subr.mxu0 0.0
  %151 = vmatpush1.msra.mxu0 %v46
  %152 = vmatprep.subr.mxu0 0.0
  %153 = vmatpush1.msra.mxu0 %v47
  %154 = vmatprep.mubr.f32.mxu0 %v80
  %155 = vmatmul.mubr.f32.gmra.mrb[0].mxu0 %v79
  %v156 = vpop.f32.mrb[0].mxu0
  %v157 = vadd.f32 %v88, %v156
  %v158 = vpop.f32.mrb[0].mxu0
  %159 = vmatprep.mubr.f32.mxu0 %v82
  %160 = vmatmul.mubr.f32.gmra.mrb[0].mxu0 %v81
  %v161 = vpop.f32.mrb[0].mxu0
  %v162 = vadd.f32 %v88, %v161
  %v163 = vpop.f32.mrb[0].mxu0
  %164 = vdwg.mxu0
  %165 = vst [vmem:[%s3] sm:$0xff] %v157
  %166 = vst [vmem:[%s3 + $0x8] sm:$0xff] %v162
  // Predicated region
  $region14: #{repr_ngram_forward.1} parent=0 // pred_check
    _
  $region15: #{repr_ngram_forward.1} parent=0 // pred_check_branch
    %168 = sbr.rel (0) target = $region17
  $region16: #{repr_ngram_forward.1} parent=0 // pred_region
    _
  $region17: #{repr_ngram_forward.1} parent=0 // pred_fallthru
    _
  // Predicated region
  $region18: #{repr_ngram_forward.1} parent=0 // pred_check
    _
  $region19: #{repr_ngram_forward.1} parent=0 // pred_check_branch
    %170 = sbr.rel (0) target = $region21
  $region20: #{repr_ngram_forward.1} parent=0 // pred_region
    _
  $region21: #{repr_ngram_forward.1} parent=0 // pred_fallthru
    _

</llo_original>
